<compile_context>
chip_gen: v6e
topology: v6e:2x2x1
jax: 0.10.0
libtpu: 0.0.40
codegen_flags: <defaults>
</compile_context>

<pallas_src>
import jax
import jax.numpy as jnp
from jax.experimental import pallas as pl
from jax.experimental.pallas import tpu as pltpu

_LANES = 128
_SUBLANES = 8
# 2 MiB per block => 2 BlockSpecs x 2 buffers x 2 MiB = 8 MiB working set,
# safely under every generation's default scoped VMEM, and >= 512 rows x 128
# lanes for f32 (the measured ~85%-of-roofline tile size on v6e).
_BLOCK_BYTES_CAP = 2 * 1024 * 1024


def _toy_kernel(theta_ref, x_ref, o_ref):
    # theta_ref: SMEM (2,) f32 -> [theta1, theta2]; compute in x's dtype.
    xv = x_ref[...]
    t1 = theta_ref[0].astype(xv.dtype)
    t2 = theta_ref[1].astype(xv.dtype)
    # -t1*x^2 + t2*x  ==  x * (t2 - t1*x)   (saves a multiply + negate)
    o_ref[...] = xv * (t2 - t1 * xv)


def toy_model_forward(x, theta1, theta2, *, modified=False):
    """Pallas implementation of ToyModel.forward (any shape / float dtype)."""
    if modified:
        # PyTorch's x.detach() only cuts gradient flow; forward is unchanged.
        x = jax.lax.stop_gradient(x)

    orig_shape = x.shape
    dtype = x.dtype
    n = x.size
    itemsize = dtype.itemsize

    theta = jnp.stack([jnp.asarray(theta1, jnp.float32),
                       jnp.asarray(theta2, jnp.float32)])

    # Lane-dense 2D view without host-side padding copies when possible.
    if n % _LANES == 0:
        rows = n // _LANES
        x2d = x.reshape(rows, _LANES)       # pure reshape, no extra HBM pass
        pad = 0
    else:
        # Rare fallback: pad only the small tail (never hit by the demo).
        pad = (-n) % _LANES
        x2d = jnp.pad(x.reshape(-1), (0, pad)).reshape(-1, _LANES)
        rows = x2d.shape[0]

    # Row tiling: single full-array block for small inputs, otherwise the
    # largest sublane-aligned tile under the per-block VMEM cap.
    rows_cap = max(_SUBLANES, _BLOCK_BYTES_CAP // (_LANES * itemsize))
    if rows <= rows_cap:
        tm = rows                           # one block == full array dims
    else:
        tm = rows_cap - (rows_cap % _SUBLANES)
    grid = (pl.cdiv(rows, tm),)             # partial final block is masked

    out2d = pl.pallas_call(
        _toy_kernel,
        out_shape=jax.ShapeDtypeStruct((rows, _LANES), dtype),
        grid_spec=pltpu.PrefetchScalarGridSpec(
            num_scalar_prefetch=0,
            grid=grid,
            in_specs=[
                pl.BlockSpec(memory_space=pltpu.SMEM),         # theta scalars
                pl.BlockSpec((tm, _LANES), lambda i: (i, 0)),  # x row tile
            ],
            out_specs=pl.BlockSpec((tm, _LANES), lambda i: (i, 0)),
        ),
        compiler_params=pltpu.CompilerParams(
            dimension_semantics=("parallel",)),  # shards grid across TCs on v7x
    )(theta, x2d)

    if pad:
        return out2d.reshape(-1)[:n].reshape(orig_shape)
    return out2d.reshape(orig_shape)


if __name__ == "__main__":
    key = jax.random.PRNGKey(0)
    # small NCHW input: batch=2, ch=4, 16x16  (2048 elems -> single-block path)
    x = jax.random.normal(key, (2, 4, 16, 16), dtype=jnp.float32)

    # deterministic params matching nn.Parameter(torch.tensor(0.5 / -0.5))
    theta1 = jnp.float32(0.5)
    theta2 = jnp.float32(-0.5)

    out = toy_model_forward(x, theta1, theta2, modified=False)
    out = jax.block_until_ready(out)

    # correctness vs plain-JAX reference (kernel uses the reassociated form
    # x*(t2 - t1*x), so allow a few f32 ulps of slack)
    ref = -theta1 * x ** 2 + theta2 * x
    assert out.shape == x.shape and out.dtype == x.dtype
    assert jnp.allclose(out, ref, rtol=1e-5, atol=1e-5), "mismatch vs reference"

    print("KERNEL_OK")
</pallas_src>

<mosaic_0001>
module attributes {stable_mosaic.version = 11 : i64} {
  func.func @_toy_kernel(%arg0: i32, %arg1: memref<2xf32, #tpu.memory_space<smem>>, %arg2: memref<16x128xf32, #tpu.memory_space<vmem>>, %arg3: memref<16x128xf32, #tpu.memory_space<vmem>>) attributes {dimension_semantics = [#tpu.dimension_semantics<parallel>], iteration_bounds = array<i64: 1>, scalar_prefetch = 0 : i64, scratch_operands = 0 : i64, tpu.core_type = #tpu.core_type<tc>, window_params = [{transform_indices = @transform_0, window_bounds = array<i64: 2>}, {transform_indices = @transform_1, window_bounds = array<i64: 16, 128>}, {transform_indices = @transform_2, window_bounds = array<i64: 16, 128>}]} {
    %c0 = arith.constant 0 : index
    %c0_0 = arith.constant 0 : index
    %0 = vector.load %arg2[%c0, %c0_0] : memref<16x128xf32, #tpu.memory_space<vmem>>, vector<16x128xf32>
    %c0_1 = arith.constant 0 : index
    %1 = memref.load %arg1[%c0_1] : memref<2xf32, #tpu.memory_space<smem>>
    %c1 = arith.constant 1 : index
    %2 = memref.load %arg1[%c1] : memref<2xf32, #tpu.memory_space<smem>>
    %3 = vector.broadcast %1 : f32 to vector<16x128xf32>
    %4 = arith.mulf %3, %0 : vector<16x128xf32>
    %5 = vector.broadcast %2 : f32 to vector<16x128xf32>
    %6 = arith.subf %5, %4 : vector<16x128xf32>
    %7 = arith.mulf %0, %6 : vector<16x128xf32>
    %c0_2 = arith.constant 0 : index
    %c0_3 = arith.constant 0 : index
    %8 = vector.load %arg3[%c0_2, %c0_3] : memref<16x128xf32, #tpu.memory_space<vmem>>, vector<16x128xf32>
    tpu.vector_store %arg3[%c0_2, %c0_3], %7 {strides = array<i32>} : memref<16x128xf32, #tpu.memory_space<vmem>>, vector<16x128xf32>,
    return
  }
  func.func @transform_0(%arg0: i32) -> i32 {
    %c0_i32 = arith.constant 0 : i32
    %c0_i32_0 = arith.constant 0 : i32
    return %c0_i32 : i32
  }
  func.func @transform_1(%arg0: i32) -> (i32, i32) {
    %c0_i32 = arith.constant 0 : i32
    %c0_i32_0 = arith.constant 0 : i32
    return %arg0, %c0_i32 : i32, i32
  }
  func.func @transform_2(%arg0: i32) -> (i32, i32) {
    %c0_i32 = arith.constant 0 : i32
    %c0_i32_0 = arith.constant 0 : i32
    return %arg0, %c0_i32 : i32, i32
  }
}

</mosaic_0001>

<llo_original>
// kernel: tpu_custom_call.1
$region0: #{tpu_custom_call.1}
  #allocation0 [shape = 'u32[]', space=smem, size = 0x4, offset = 0x4, fixed_abs, tag = 'smem constant byte address 0x4 - core index']
  #allocation1 [shape = 'u32[144,128]{1,0:T(1,128)}', space=vmem, size = 0x12000, scoped, tag = 'internal scratch']
  %s0 = inlined_call_operand.hbm [shape: f32[2], index: 0, kind: input, shape index: {}]
  %s1 = inlined_call_operand.hbm [shape: f32[16,128], index: 1, kind: input, shape index: {}]
  %s2 = inlined_call_operand.hbm [shape: f32[16,128], index: 2, kind: output, shape index: {}]
  %s3 = sld [smem:[#allocation0]]
  $region26: #{tpu_custom_call.1} parent=0
    _
  %s5 = ssub.s32 1, %s3
  %s6 = scalar_select 0, %s5, %s3
  $region1: #{tpu_custom_call.1} parent=0
    #allocation2 [shape = 'u8[512]{0}', space=smem, size = 0x200, scoped, tag = 'input window, operand 0, single buffered']
    #allocation3 [shape = 's32[1]{0}', space=sflag, size = 0x4, scoped, tag = 'scoped memory for tpu_custom_call.1']
    #allocation4 [shape = 's32[1]{0}', space=sflag, size = 0x4, scoped, tag = 'scoped memory for tpu_custom_call.1']
    #allocation5 [shape = 's32[1]{0}', space=sflag, size = 0x4, scoped, tag = 'scoped memory for tpu_custom_call.1']
    #allocation6 [shape = 'u8[8192]{0}', space=vmem, size = 0x2000, scoped, tag = 'input window, operand 1, single buffered']
    #allocation7 [shape = 'u8[8192]{0}', space=vmem, size = 0x2000, scoped, tag = 'output window, operand 0, single buffered']
    %7 = vsyncpa [#allocation5], 0
    %8 = vsyncpa [#allocation3], 0
    %9 = vsyncpa [#allocation4], 0
    // Predicated region
    $region2: #{tpu_custom_call.1} parent=1 // pred_check
      _
    $region3: #{tpu_custom_call.1} parent=1 // pred_check_branch
      %11 = sbr.rel (0) target = $region5
    $region4: #{tpu_custom_call.1} parent=1 // pred_region
      %s13 = ssub.s32 16, 16
      %14 = vsyncadd [#allocation5], %s13
      %17 = dma.hbm_to_smem %s0, 16, [#allocation2], [#allocation5]
    $region5: #{tpu_custom_call.1} parent=1 // pred_fallthru
      _
    // Predicated region
    $region6: #{tpu_custom_call.1} parent=1 // pred_check
      _
    $region7: #{tpu_custom_call.1} parent=1 // pred_check_branch
      %19 = sbr.rel (0) target = $region9
    $region8: #{tpu_custom_call.1} parent=1 // pred_region
      %s21 = ssub.s32 256, 256
      %22 = vsyncadd [#allocation3], %s21
      %s23 = sshll.u32 [#allocation6], 4
      %s24 = int_to_ptr.vmem [resolvable:$true] %s23
      %29 = dma.hbm_to_vmem [thread:$0]  %s1, 256, %s24, [#allocation3], 128, 128, 8
    $region9: #{tpu_custom_call.1} parent=1 // pred_fallthru
      _
    // Predicated region
    $region10: #{tpu_custom_call.1} parent=1 // pred_check
      _
    $region11: #{tpu_custom_call.1} parent=1 // pred_check_branch
      %31 = sbr.rel (0) target = $region13
    $region12: #{tpu_custom_call.1} parent=1 // pred_region
      %32 = dma.done [#allocation5], 16
    $region13: #{tpu_custom_call.1} parent=1 // pred_fallthru
      _
    // Predicated region
    $region14: #{tpu_custom_call.1} parent=1 // pred_check
      _
    $region15: #{tpu_custom_call.1} parent=1 // pred_check_branch
      %34 = sbr.rel (0) target = $region17
    $region16: #{tpu_custom_call.1} parent=1 // pred_region
      %35 = dma.done [#allocation3], 256
    $region17: #{tpu_custom_call.1} parent=1 // pred_fallthru
      _
    %36 = sfence
    %v37 = vld [vmem:[#allocation6] sm:$0xff]
    %v38 = vld [vmem:[#allocation6 + $0x8] sm:$0xff]
    %s39 = sld [smem:[#allocation2]]
    %s40 = sld [smem:[#allocation2 + $0x1]]
    %v41 = vstv %s39
    %v42 = vmul.f32 %v41, %v37
    %v43 = vmul.f32 %v41, %v38
    %v44 = vstv %s40
    %v45 = vsub.f32 %v44, %v42
    %v46 = vsub.f32 %v44, %v43
    %v47 = vmul.f32 %v37, %v45
    %v48 = vmul.f32 %v38, %v46
    %49 = vst [vmem:[#allocation7] sm:$0xff] %v47
    %50 = vst [vmem:[#allocation7 + $0x8] sm:$0xff] %v48
    // Predicated region
    $region18: #{tpu_custom_call.1} parent=1 // pred_check
      _
    $region19: #{tpu_custom_call.1} parent=1 // pred_check_branch
      %52 = sbr.rel (0) target = $region21
    $region20: #{tpu_custom_call.1} parent=1 // pred_region
      %s54 = ssub.s32 256, 256
      %55 = vsyncadd [#allocation4], %s54
      %s56 = sshll.u32 [#allocation7], 4
      %s57 = int_to_ptr.vmem [resolvable:$true] %s56
      %62 = dma.vmem_to_hbm [thread:$0]  %s57, 256, %s2, [#allocation4], 128, 128, 8
    $region21: #{tpu_custom_call.1} parent=1 // pred_fallthru
      _
    // Predicated region
    $region22: #{tpu_custom_call.1} parent=1 // pred_check
      _
    $region23: #{tpu_custom_call.1} parent=1 // pred_check_branch
      %64 = sbr.rel (0) target = $region25
    $region24: #{tpu_custom_call.1} parent=1 // pred_region
      %65 = dma.done [#allocation4], 256
    $region25: #{tpu_custom_call.1} parent=1 // pred_fallthru
      _
    %66 = vsyncpa [#allocation3], 1
    %67 = vsyncpa [#allocation4], 1
    %68 = vsyncpa [#allocation5], 1

</llo_original>
